<compile_context>
chip_gen: v6e
topology: v6e:2x2x1
jax: 0.10.0
libtpu: 0.0.40
codegen_flags: <defaults>
</compile_context>

<pallas_src>
import functools

import jax
import jax.numpy as jnp
from jax.experimental import pallas as pl
from jax.experimental.pallas import tpu as pltpu


def _encoder_tcfpn_kernel(x_ref, w_ref, b_ref, o_ref, y_ref, *,
                          ksize, t_conv, t_out):
    """One grid step = one batch element.

    x_ref : (T_pad, C_in)    zero-padded input, time on sublanes
    w_ref : (k, C_in, C_out) BN-folded conv weights (one matrix per tap)
    b_ref : (1, C_out)       BN-folded bias
    o_ref : (T_out, C_out)   pooled output
    y_ref : (T_conv, C_out)  f32 VMEM scratch holding the pre-pool activation
    """
    c_in = x_ref.shape[-1]
    c_out = o_ref.shape[-1]

    acc = jnp.zeros((t_conv, c_out), jnp.float32)
    # k-tap "same" conv as k shifted accumulations (static Python loop; k small).
    for j in range(ksize):
        xj = x_ref[j:j + t_conv, :].astype(jnp.float32)      # (T_conv, C_in)
        wj = w_ref[j].astype(jnp.float32)                     # (C_in, C_out)
        for ci in range(c_in):                                # exact f32 FMAs
            acc = acc + xj[:, ci:ci + 1] * wj[ci:ci + 1, :]   # (T_conv, C_out)

    acc = acc + b_ref[...].astype(jnp.float32)                # per-channel bias
    # Dropout2d is identity in eval mode; ReLU:
    y_ref[...] = jnp.maximum(acc, jnp.float32(0.0))

    # MaxPool1d(kernel_size=2, stride=2): two stride-2 sublane loads.
    even = y_ref[pl.ds(0, t_out, stride=2), :]
    odd = y_ref[pl.ds(1, t_out, stride=2), :]
    o_ref[...] = jnp.maximum(even, odd).astype(o_ref.dtype)


def encoder_tcfpn(x, conv_w, conv_b, bn_gamma, bn_beta, bn_mean, bn_var, *,
                  eps=1e-5):
    """JAX/Pallas equivalent of Encoder_TCFPN().eval()(x).

    x: (B, C_in, T); conv_w: (C_out, C_in, k); conv_b / bn_*: (C_out,)
    Returns (B, C_out, T_conv // 2) matching the PyTorch output layout.
    """
    B, c_in, T = x.shape
    c_out, _, ksize = conv_w.shape
    pad = (ksize - 1) // 2
    t_pad = T + 2 * pad
    t_conv = t_pad - ksize + 1
    t_out = t_conv // 2

    # Fold inference-mode BatchNorm1d into the conv weight & bias.
    scale = bn_gamma / jnp.sqrt(bn_var + eps)                 # (C_out,)
    w_f = conv_w * scale[:, None, None]
    b_f = (conv_b - bn_mean) * scale + bn_beta

    # Layout plumbing: time on sublanes, channels on lanes.
    xt = jnp.transpose(x, (0, 2, 1))                          # (B, T, C_in)
    xt = jnp.pad(xt, ((0, 0), (pad, pad), (0, 0)))            # (B, T_pad, C_in)
    wt = jnp.transpose(w_f, (2, 1, 0))                        # (k, C_in, C_out)
    bt = b_f.reshape(1, c_out)

    kernel = functools.partial(_encoder_tcfpn_kernel,
                               ksize=ksize, t_conv=t_conv, t_out=t_out)

    out = pl.pallas_call(
        kernel,
        out_shape=jax.ShapeDtypeStruct((B, t_out, c_out), x.dtype),
        grid_spec=pltpu.PrefetchScalarGridSpec(
            num_scalar_prefetch=0,
            grid=(B,),
            in_specs=[
                pl.BlockSpec((pl.Squeezed(), t_pad, c_in),
                             lambda b: (b, 0, 0)),
                pl.BlockSpec((ksize, c_in, c_out), lambda b: (0, 0, 0)),
                pl.BlockSpec((1, c_out), lambda b: (0, 0)),
            ],
            out_specs=pl.BlockSpec((pl.Squeezed(), t_out, c_out),
                                   lambda b: (b, 0, 0)),
            scratch_shapes=[pltpu.VMEM((t_conv, c_out), jnp.float32)],
        ),
        compiler_params=pltpu.CompilerParams(
            dimension_semantics=("parallel",)),
    )(xt, wt, bt)

    return jnp.transpose(out, (0, 2, 1))                      # (B, C_out, T_out)


def _encoder_tcfpn_ref(x, conv_w, conv_b, bn_gamma, bn_beta, bn_mean, bn_var,
                       *, eps=1e-5):
    """Pure-JAX reference matching the PyTorch forward (eval mode)."""
    B, c_in, T = x.shape
    c_out, _, ksize = conv_w.shape
    pad = (ksize - 1) // 2
    xp = jnp.pad(x, ((0, 0), (0, 0), (pad, pad)))
    t_conv = T + 2 * pad - ksize + 1
    y = jnp.zeros((B, c_out, t_conv), jnp.float32)
    for j in range(ksize):
        y = y + jnp.einsum("oc,bct->bot", conv_w[:, :, j],
                           xp[:, :, j:j + t_conv],
                           precision=jax.lax.Precision.HIGHEST)
    y = y + conv_b[None, :, None]
    y = ((y - bn_mean[None, :, None])
         / jnp.sqrt(bn_var[None, :, None] + eps)
         * bn_gamma[None, :, None] + bn_beta[None, :, None])
    y = jnp.maximum(y, 0.0)                                   # dropout(eval)=id
    t_out = t_conv // 2
    y = jnp.max(y[:, :, :t_out * 2].reshape(B, c_out, t_out, 2), axis=-1)
    return y.astype(x.dtype)


if __name__ == "__main__":
    key = jax.random.PRNGKey(0)
    kx, kw, kb, kg, kbe, km, kv = jax.random.split(key, 7)

    B, C_IN, C_OUT, K, T = 2, 4, 8, 3, 16
    x = jax.random.normal(kx, (B, C_IN, T), dtype=jnp.float32)
    conv_w = 0.3 * jax.random.normal(kw, (C_OUT, C_IN, K), dtype=jnp.float32)
    conv_b = 0.1 * jax.random.normal(kb, (C_OUT,), dtype=jnp.float32)
    bn_gamma = 1.0 + 0.2 * jax.random.normal(kg, (C_OUT,), dtype=jnp.float32)
    bn_beta = 0.1 * jax.random.normal(kbe, (C_OUT,), dtype=jnp.float32)
    bn_mean = 0.1 * jax.random.normal(km, (C_OUT,), dtype=jnp.float32)
    bn_var = jax.random.uniform(kv, (C_OUT,), dtype=jnp.float32,
                                minval=0.5, maxval=1.5)

    out = jax.block_until_ready(
        encoder_tcfpn(x, conv_w, conv_b, bn_gamma, bn_beta, bn_mean, bn_var))
    ref = jax.block_until_ready(
        _encoder_tcfpn_ref(x, conv_w, conv_b, bn_gamma, bn_beta, bn_mean,
                           bn_var))

    assert out.shape == (B, C_OUT, T // 2), out.shape
    max_err = float(jnp.max(jnp.abs(out - ref)))
    assert jnp.allclose(out, ref, atol=2e-5, rtol=2e-5), max_err
    print("KERNEL_OK")
</pallas_src>

<mosaic_0001>
module attributes {stable_mosaic.version = 11 : i64} {
  func.func @_encoder_tcfpn_kernel(%arg0: i32, %arg1: memref<1x18x4xf32, #tpu.memory_space<vmem>>, %arg2: memref<3x4x8xf32, #tpu.memory_space<vmem>>, %arg3: memref<1x8xf32, #tpu.memory_space<vmem>>, %arg4: memref<1x8x8xf32, #tpu.memory_space<vmem>>, %arg5: memref<16x8xf32, #tpu.memory_space<vmem>>) attributes {dimension_semantics = [#tpu.dimension_semantics<parallel>], iteration_bounds = array<i64: 2>, scalar_prefetch = 0 : i64, scratch_operands = 1 : i64, tpu.core_type = #tpu.core_type<tc>, window_params = [{transform_indices = @transform_0, window_bounds = array<i64: 1, 18, 4>}, {pipeline_mode = #tpu.pipeline_mode<synchronous>, transform_indices = @transform_1, window_bounds = array<i64: 3, 4, 8>}, {pipeline_mode = #tpu.pipeline_mode<synchronous>, transform_indices = @transform_2, window_bounds = array<i64: 1, 8>}, {transform_indices = @transform_3, window_bounds = array<i64: 1, 8, 8>}]} {
    %cst = arith.constant 0.000000e+00 : f32
    %0 = vector.broadcast %cst : f32 to vector<16x8xf32>
    %c0 = arith.constant 0 : index
    %c0_0 = arith.constant 0 : index
    %c0_1 = arith.constant 0 : index
    %1 = vector.load %arg1[%c0, %c0_0, %c0_1] : memref<1x18x4xf32, #tpu.memory_space<vmem>>, vector<1x16x4xf32>
    %2 = vector.shape_cast %1 : vector<1x16x4xf32> to vector<16x4xf32>
    %c0_2 = arith.constant 0 : index
    %c0_3 = arith.constant 0 : index
    %c0_4 = arith.constant 0 : index
    %3 = vector.load %arg2[%c0_2, %c0_3, %c0_4] : memref<3x4x8xf32, #tpu.memory_space<vmem>>, vector<1x4x8xf32>
    %4 = vector.shape_cast %3 : vector<1x4x8xf32> to vector<4x8xf32>
    %5 = vector.extract_strided_slice %2 {offsets = [0, 0], sizes = [16, 1], strides = [1, 1]} : vector<16x4xf32> to vector<16x1xf32>
    %6 = vector.extract_strided_slice %4 {offsets = [0, 0], sizes = [1, 8], strides = [1, 1]} : vector<4x8xf32> to vector<1x8xf32>
    %7 = vector.broadcast %5 : vector<16x1xf32> to vector<16x8xf32>
    %8 = vector.broadcast %6 : vector<1x8xf32> to vector<16x8xf32>
    %9 = arith.mulf %7, %8 : vector<16x8xf32>
    %10 = arith.addf %0, %9 : vector<16x8xf32>
    %11 = vector.extract_strided_slice %2 {offsets = [0, 1], sizes = [16, 1], strides = [1, 1]} : vector<16x4xf32> to vector<16x1xf32>
    %12 = vector.extract_strided_slice %4 {offsets = [1, 0], sizes = [1, 8], strides = [1, 1]} : vector<4x8xf32> to vector<1x8xf32>
    %13 = vector.broadcast %11 : vector<16x1xf32> to vector<16x8xf32>
    %14 = vector.broadcast %12 : vector<1x8xf32> to vector<16x8xf32>
    %15 = arith.mulf %13, %14 : vector<16x8xf32>
    %16 = arith.addf %10, %15 : vector<16x8xf32>
    %17 = vector.extract_strided_slice %2 {offsets = [0, 2], sizes = [16, 1], strides = [1, 1]} : vector<16x4xf32> to vector<16x1xf32>
    %18 = vector.extract_strided_slice %4 {offsets = [2, 0], sizes = [1, 8], strides = [1, 1]} : vector<4x8xf32> to vector<1x8xf32>
    %19 = vector.broadcast %17 : vector<16x1xf32> to vector<16x8xf32>
    %20 = vector.broadcast %18 : vector<1x8xf32> to vector<16x8xf32>
    %21 = arith.mulf %19, %20 : vector<16x8xf32>
    %22 = arith.addf %16, %21 : vector<16x8xf32>
    %23 = vector.extract_strided_slice %2 {offsets = [0, 3], sizes = [16, 1], strides = [1, 1]} : vector<16x4xf32> to vector<16x1xf32>
    %24 = vector.extract_strided_slice %4 {offsets = [3, 0], sizes = [1, 8], strides = [1, 1]} : vector<4x8xf32> to vector<1x8xf32>
    %25 = vector.broadcast %23 : vector<16x1xf32> to vector<16x8xf32>
    %26 = vector.broadcast %24 : vector<1x8xf32> to vector<16x8xf32>
    %27 = arith.mulf %25, %26 : vector<16x8xf32>
    %28 = arith.addf %22, %27 : vector<16x8xf32>
    %c0_5 = arith.constant 0 : index
    %c1 = arith.constant 1 : index
    %c0_6 = arith.constant 0 : index
    %29 = vector.load %arg1[%c0_5, %c1, %c0_6] : memref<1x18x4xf32, #tpu.memory_space<vmem>>, vector<1x16x4xf32>
    %30 = vector.shape_cast %29 : vector<1x16x4xf32> to vector<16x4xf32>
    %c1_7 = arith.constant 1 : index
    %c0_8 = arith.constant 0 : index
    %c0_9 = arith.constant 0 : index
    %31 = vector.load %arg2[%c1_7, %c0_8, %c0_9] : memref<3x4x8xf32, #tpu.memory_space<vmem>>, vector<1x4x8xf32>
    %32 = vector.shape_cast %31 : vector<1x4x8xf32> to vector<4x8xf32>
    %33 = vector.extract_strided_slice %30 {offsets = [0, 0], sizes = [16, 1], strides = [1, 1]} : vector<16x4xf32> to vector<16x1xf32>
    %34 = vector.extract_strided_slice %32 {offsets = [0, 0], sizes = [1, 8], strides = [1, 1]} : vector<4x8xf32> to vector<1x8xf32>
    %35 = vector.broadcast %33 : vector<16x1xf32> to vector<16x8xf32>
    %36 = vector.broadcast %34 : vector<1x8xf32> to vector<16x8xf32>
    %37 = arith.mulf %35, %36 : vector<16x8xf32>
    %38 = arith.addf %28, %37 : vector<16x8xf32>
    %39 = vector.extract_strided_slice %30 {offsets = [0, 1], sizes = [16, 1], strides = [1, 1]} : vector<16x4xf32> to vector<16x1xf32>
    %40 = vector.extract_strided_slice %32 {offsets = [1, 0], sizes = [1, 8], strides = [1, 1]} : vector<4x8xf32> to vector<1x8xf32>
    %41 = vector.broadcast %39 : vector<16x1xf32> to vector<16x8xf32>
    %42 = vector.broadcast %40 : vector<1x8xf32> to vector<16x8xf32>
    %43 = arith.mulf %41, %42 : vector<16x8xf32>
    %44 = arith.addf %38, %43 : vector<16x8xf32>
    %45 = vector.extract_strided_slice %30 {offsets = [0, 2], sizes = [16, 1], strides = [1, 1]} : vector<16x4xf32> to vector<16x1xf32>
    %46 = vector.extract_strided_slice %32 {offsets = [2, 0], sizes = [1, 8], strides = [1, 1]} : vector<4x8xf32> to vector<1x8xf32>
    %47 = vector.broadcast %45 : vector<16x1xf32> to vector<16x8xf32>
    %48 = vector.broadcast %46 : vector<1x8xf32> to vector<16x8xf32>
    %49 = arith.mulf %47, %48 : vector<16x8xf32>
    %50 = arith.addf %44, %49 : vector<16x8xf32>
    %51 = vector.extract_strided_slice %30 {offsets = [0, 3], sizes = [16, 1], strides = [1, 1]} : vector<16x4xf32> to vector<16x1xf32>
    %52 = vector.extract_strided_slice %32 {offsets = [3, 0], sizes = [1, 8], strides = [1, 1]} : vector<4x8xf32> to vector<1x8xf32>
    %53 = vector.broadcast %51 : vector<16x1xf32> to vector<16x8xf32>
    %54 = vector.broadcast %52 : vector<1x8xf32> to vector<16x8xf32>
    %55 = arith.mulf %53, %54 : vector<16x8xf32>
    %56 = arith.addf %50, %55 : vector<16x8xf32>
    %c0_10 = arith.constant 0 : index
    %c2 = arith.constant 2 : index
    %c0_11 = arith.constant 0 : index
    %57 = vector.load %arg1[%c0_10, %c2, %c0_11] : memref<1x18x4xf32, #tpu.memory_space<vmem>>, vector<1x16x4xf32>
    %58 = vector.shape_cast %57 : vector<1x16x4xf32> to vector<16x4xf32>
    %c2_12 = arith.constant 2 : index
    %c0_13 = arith.constant 0 : index
    %c0_14 = arith.constant 0 : index
    %59 = vector.load %arg2[%c2_12, %c0_13, %c0_14] : memref<3x4x8xf32, #tpu.memory_space<vmem>>, vector<1x4x8xf32>
    %60 = vector.shape_cast %59 : vector<1x4x8xf32> to vector<4x8xf32>
    %61 = vector.extract_strided_slice %58 {offsets = [0, 0], sizes = [16, 1], strides = [1, 1]} : vector<16x4xf32> to vector<16x1xf32>
    %62 = vector.extract_strided_slice %60 {offsets = [0, 0], sizes = [1, 8], strides = [1, 1]} : vector<4x8xf32> to vector<1x8xf32>
    %63 = vector.broadcast %61 : vector<16x1xf32> to vector<16x8xf32>
    %64 = vector.broadcast %62 : vector<1x8xf32> to vector<16x8xf32>
    %65 = arith.mulf %63, %64 : vector<16x8xf32>
    %66 = arith.addf %56, %65 : vector<16x8xf32>
    %67 = vector.extract_strided_slice %58 {offsets = [0, 1], sizes = [16, 1], strides = [1, 1]} : vector<16x4xf32> to vector<16x1xf32>
    %68 = vector.extract_strided_slice %60 {offsets = [1, 0], sizes = [1, 8], strides = [1, 1]} : vector<4x8xf32> to vector<1x8xf32>
    %69 = vector.broadcast %67 : vector<16x1xf32> to vector<16x8xf32>
    %70 = vector.broadcast %68 : vector<1x8xf32> to vector<16x8xf32>
    %71 = arith.mulf %69, %70 : vector<16x8xf32>
    %72 = arith.addf %66, %71 : vector<16x8xf32>
    %73 = vector.extract_strided_slice %58 {offsets = [0, 2], sizes = [16, 1], strides = [1, 1]} : vector<16x4xf32> to vector<16x1xf32>
    %74 = vector.extract_strided_slice %60 {offsets = [2, 0], sizes = [1, 8], strides = [1, 1]} : vector<4x8xf32> to vector<1x8xf32>
    %75 = vector.broadcast %73 : vector<16x1xf32> to vector<16x8xf32>
    %76 = vector.broadcast %74 : vector<1x8xf32> to vector<16x8xf32>
    %77 = arith.mulf %75, %76 : vector<16x8xf32>
    %78 = arith.addf %72, %77 : vector<16x8xf32>
    %79 = vector.extract_strided_slice %58 {offsets = [0, 3], sizes = [16, 1], strides = [1, 1]} : vector<16x4xf32> to vector<16x1xf32>
    %80 = vector.extract_strided_slice %60 {offsets = [3, 0], sizes = [1, 8], strides = [1, 1]} : vector<4x8xf32> to vector<1x8xf32>
    %81 = vector.broadcast %79 : vector<16x1xf32> to vector<16x8xf32>
    %82 = vector.broadcast %80 : vector<1x8xf32> to vector<16x8xf32>
    %83 = arith.mulf %81, %82 : vector<16x8xf32>
    %84 = arith.addf %78, %83 : vector<16x8xf32>
    %c0_15 = arith.constant 0 : index
    %c0_16 = arith.constant 0 : index
    %85 = vector.load %arg3[%c0_15, %c0_16] : memref<1x8xf32, #tpu.memory_space<vmem>>, vector<1x8xf32>
    %86 = vector.broadcast %85 : vector<1x8xf32> to vector<16x8xf32>
    %87 = arith.addf %84, %86 : vector<16x8xf32>
    %cst_17 = arith.constant 0.000000e+00 : f32
    %88 = vector.broadcast %cst_17 : f32 to vector<16x8xf32>
    %89 = arith.maximumf %87, %88 : vector<16x8xf32>
    %c0_18 = arith.constant 0 : index
    %c0_19 = arith.constant 0 : index
    %90 = vector.load %arg5[%c0_18, %c0_19] : memref<16x8xf32, #tpu.memory_space<vmem>>, vector<16x8xf32>
    tpu.vector_store %arg5[%c0_18, %c0_19], %89 {strides = array<i32>} : memref<16x8xf32, #tpu.memory_space<vmem>>, vector<16x8xf32>,
    %c0_20 = arith.constant 0 : index
    %c0_21 = arith.constant 0 : index
    %91 = tpu.strided_load %arg5[%c0_20, %c0_21] {strides = array<i32: 2, 1>} : memref<16x8xf32, #tpu.memory_space<vmem>>, vector<8x8xf32>
    %c1_22 = arith.constant 1 : index
    %c0_23 = arith.constant 0 : index
    %92 = tpu.strided_load %arg5[%c1_22, %c0_23] {strides = array<i32: 2, 1>} : memref<16x8xf32, #tpu.memory_space<vmem>>, vector<8x8xf32>
    %93 = arith.maximumf %91, %92 : vector<8x8xf32>
    %c0_24 = arith.constant 0 : index
    %c0_25 = arith.constant 0 : index
    %c0_26 = arith.constant 0 : index
    %94 = vector.load %arg4[%c0_24, %c0_25, %c0_26] : memref<1x8x8xf32, #tpu.memory_space<vmem>>, vector<1x8x8xf32>
    %95 = vector.shape_cast %94 : vector<1x8x8xf32> to vector<8x8xf32>
    %96 = vector.shape_cast %93 : vector<8x8xf32> to vector<1x8x8xf32>
    tpu.vector_store %arg4[%c0_24, %c0_25, %c0_26], %96 {strides = array<i32>} : memref<1x8x8xf32, #tpu.memory_space<vmem>>, vector<1x8x8xf32>,
    return
  }
  func.func @transform_0(%arg0: i32) -> (i32, i32, i32) {
    %c0_i32 = arith.constant 0 : i32
    %c0_i32_0 = arith.constant 0 : i32
    %c0_i32_1 = arith.constant 0 : i32
    return %arg0, %c0_i32, %c0_i32_0 : i32, i32, i32
  }
  func.func @transform_1(%arg0: i32) -> (i32, i32, i32) {
    %c0_i32 = arith.constant 0 : i32
    %c0_i32_0 = arith.constant 0 : i32
    %c0_i32_1 = arith.constant 0 : i32
    %c0_i32_2 = arith.constant 0 : i32
    return %c0_i32, %c0_i32_0, %c0_i32_1 : i32, i32, i32
  }
  func.func @transform_2(%arg0: i32) -> (i32, i32) {
    %c0_i32 = arith.constant 0 : i32
    %c0_i32_0 = arith.constant 0 : i32
    %c0_i32_1 = arith.constant 0 : i32
    return %c0_i32, %c0_i32_0 : i32, i32
  }
  func.func @transform_3(%arg0: i32) -> (i32, i32, i32) {
    %c0_i32 = arith.constant 0 : i32
    %c0_i32_0 = arith.constant 0 : i32
    %c0_i32_1 = arith.constant 0 : i32
    return %arg0, %c0_i32, %c0_i32_0 : i32, i32, i32
  }
}

</mosaic_0001>

<llo_original>
// kernel: tpu_custom_call.1
$region0: #{tpu_custom_call.1}
  #allocation0 [shape = 'u32[]', space=smem, size = 0x4, offset = 0x4, fixed_abs, tag = 'smem constant byte address 0x4 - core index']
  #allocation1 [shape = 'u32[144,128]{1,0:T(1,128)}', space=vmem, size = 0x12000, scoped, tag = 'internal scratch']
  #allocation2 [shape = 'f32[16,8]{1,0:T(8,128)}', space=vmem, size = 0x2000, scoped, tag = 'scratch operand']
  %s0 = inlined_call_operand.vmem [shape: f32[2,18,4], index: 0, kind: input, shape index: {}]
  %s1 = inlined_call_operand.vmem [shape: f32[3,4,8], index: 1, kind: input, shape index: {}]
  %s2 = inlined_call_operand.vmem [shape: f32[1,8], index: 2, kind: input, shape index: {}]
  %s3 = inlined_call_operand.hbm [shape: f32[2,8,8], index: 3, kind: output, shape index: {}]
  %s4 = sld [smem:[#allocation0]]
  $region45: #{tpu_custom_call.1} parent=0
    _
  %s6 = ssub.s32 1, %s4
  %s7 = scalar_select 0, %s6, %s4
  $region1: #{tpu_custom_call.1} parent=0
    #allocation3 [shape = 'u8[8192]{0}', space=vmem, size = 0x2000, scoped, tag = 'output window, operand 0']
    #allocation4 [shape = 's32[2]{0}', space=sflag, size = 0x8, scoped, tag = 'scoped memory for tpu_custom_call.1']
    %8 = vsyncpa [#allocation4], 0
    %s9 = scalar_lea.sflag [#allocation4], 1
    %10 = vsyncpa %s9, 0
    loop: start=0, step=1, limit=4
    $region2: #{tpu_custom_call.1} parent=1 // loop_pre_header
      _
    $region3: #{tpu_custom_call.1} parent=1 // loop_header
      %s12 = sphi 0, %s16
      %p13 = scmp.ge.s32.totalorder %s12, 4
      %s22 = sphi 0, %s24
      %s25 = sphi 0, %s22
      %s26 = sphi 0, %s25
      %s42 = sphi 0, %s26
      %s46 = sphi 0, %s46
      %s48 = sphi 0, %s46
      %s49 = sphi 0, %s48
      %s63 = sphi 0, %s49
      %s67 = sphi 0, %s67
      %s69 = sphi 0, %s67
      %s70 = sphi 0, %s69
      %s84 = sphi 0, %s70
      %s90 = sphi 0, %s92
      %s93 = sphi 0, %s90
      %s94 = sphi 0, %s93
      %s110 = sphi 0, %s94
    $region4: #{tpu_custom_call.1} parent=1 // loop_header_branch
      %15 = sbr.rel (%p13) target = $region8
    $region5: #{tpu_custom_call.1} parent=1 // loop_body
      %s17 = ssub.s32 %s12, 1
      %s18 = ssub.s32 %s12, 2
      %s19 = sadd.s32 %s12, 1
      %s20 = ssub.s32 %s12, %s19
      %p21 = scmp.eq.s32.totalorder %s20, 0
      %s23 = sadd.s32 %s22, 1
      %s24 = scalar_select %p21, %s22, %s23
      %p27 = pneg %p21
      %p28 = scmp.eq.s32.totalorder %s12, 1
      %p29 = por %p27, %p28
      %p30 = scmp.ne.s32.totalorder %s22, %s25
      %p31 = scmp.eq.s32.totalorder %s12, 0
      %p32 = por %p30, %p31
      %p33 = scmp.ne.s32.totalorder %s22, %s25
      %p34 = scmp.eq.s32.totalorder %s17, 1
      %p35 = por %p33, %p34
      %p36 = scmp.ne.s32.totalorder %s25, %s26
      %p37 = scmp.eq.s32.totalorder %s17, 0
      %p38 = por %p36, %p37
      %p39 = scmp.ne.s32.totalorder %s25, %s26
      %p40 = scmp.eq.s32.totalorder %s18, 1
      %p41 = por %p39, %p40
      %p43 = scmp.ne.s32.totalorder %s26, %s42
      %p44 = scmp.eq.s32.totalorder %s18, 0
      %p45 = por %p43, %p44
      %s47 = sadd.s32 %s46, 1
      %p50 = scmp.eq.s32.totalorder %s12, 1
      %p51 = scmp.ne.s32.totalorder %s46, %s48
      %p52 = scmp.eq.s32.totalorder %s12, 0
      %p53 = por %p51, %p52
      %p54 = scmp.ne.s32.totalorder %s46, %s48
      %p55 = scmp.eq.s32.totalorder %s17, 1
      %p56 = por %p54, %p55
      %p57 = scmp.ne.s32.totalorder %s48, %s49
      %p58 = scmp.eq.s32.totalorder %s17, 0
      %p59 = por %p57, %p58
      %p60 = scmp.ne.s32.totalorder %s48, %s49
      %p61 = scmp.eq.s32.totalorder %s18, 1
      %p62 = por %p60, %p61
      %p64 = scmp.ne.s32.totalorder %s49, %s63
      %p65 = scmp.eq.s32.totalorder %s18, 0
      %p66 = por %p64, %p65
      %s68 = sadd.s32 %s67, 1
      %p71 = scmp.eq.s32.totalorder %s12, 1
      %p72 = scmp.ne.s32.totalorder %s67, %s69
      %p73 = scmp.eq.s32.totalorder %s12, 0
      %p74 = por %p72, %p73
      %p75 = scmp.ne.s32.totalorder %s67, %s69
      %p76 = scmp.eq.s32.totalorder %s17, 1
      %p77 = por %p75, %p76
      %p78 = scmp.ne.s32.totalorder %s69, %s70
      %p79 = scmp.eq.s32.totalorder %s17, 0
      %p80 = por %p78, %p79
      %p81 = scmp.ne.s32.totalorder %s69, %s70
      %p82 = scmp.eq.s32.totalorder %s18, 1
      %p83 = por %p81, %p82
      %p85 = scmp.ne.s32.totalorder %s70, %s84
      %p86 = scmp.eq.s32.totalorder %s18, 0
      %p87 = por %p85, %p86
      %s88 = ssub.s32 %s12, %s19
      %p89 = scmp.eq.s32.totalorder %s88, 0
      %s91 = sadd.s32 %s90, 1
      %s92 = scalar_select %p89, %s90, %s91
      %p95 = pneg %p89
      %p96 = scmp.eq.s32.totalorder %s12, 1
      %p97 = por %p95, %p96
      %p98 = scmp.ne.s32.totalorder %s90, %s93
      %p99 = scmp.eq.s32.totalorder %s12, 0
      %p100 = por %p98, %p99
      %p101 = scmp.ne.s32.totalorder %s90, %s93
      %p102 = scmp.eq.s32.totalorder %s17, 1
      %p103 = por %p101, %p102
      %p104 = scmp.ne.s32.totalorder %s93, %s94
      %p105 = scmp.eq.s32.totalorder %s17, 0
      %p106 = por %p104, %p105
      %p107 = scmp.ne.s32.totalorder %s93, %s94
      %p108 = scmp.eq.s32.totalorder %s18, 1
      %p109 = por %p107, %p108
      %p111 = scmp.ne.s32.totalorder %s94, %s110
      %p112 = scmp.eq.s32.totalorder %s18, 0
      %p113 = por %p111, %p112
      %p114 = scmp.le.s32.totalorder 1, %s12
      %p115 = scmp.lt.s32.totalorder %s12, 3
      %p116 = pnand %p114, %p115
      %p117 = pneg %p116
      // Predicated region
      $region9: #{tpu_custom_call.1} parent=5 // pred_check
        _
      $region10: #{tpu_custom_call.1} parent=5 // pred_check_branch
        %119 = sbr.rel (%p116) target = $region12
      $region11: #{tpu_custom_call.1} parent=5 // pred_region
        %s120 = ssub.s32 %s12, 1
        // Predicated region
        $region13: #{tpu_custom_call.1} parent=11 // pred_check
          %p121 = pneg %p59
        $region14: #{tpu_custom_call.1} parent=11 // pred_check_branch
          %123 = sbr.rel (%p121) target = $region16
        $region15: #{tpu_custom_call.1} parent=11 // pred_region
          _
        $region16: #{tpu_custom_call.1} parent=11 // pred_fallthru
          _
        // Predicated region
        $region17: #{tpu_custom_call.1} parent=11 // pred_check
          %p124 = pneg %p80
        $region18: #{tpu_custom_call.1} parent=11 // pred_check_branch
          %126 = sbr.rel (%p124) target = $region20
        $region19: #{tpu_custom_call.1} parent=11 // pred_region
          _
        $region20: #{tpu_custom_call.1} parent=11 // pred_fallthru
          _
      $region12: #{tpu_custom_call.1} parent=5 // pred_fallthru
        _
      %p127 = scmp.lt.s32.totalorder %s12, 2
      // Predicated region
      $region21: #{tpu_custom_call.1} parent=5 // pred_check
        %p128 = pneg %p127
      $region22: #{tpu_custom_call.1} parent=5 // pred_check_branch
        %130 = sbr.rel (%p128) target = $region24
      $region23: #{tpu_custom_call.1} parent=5 // pred_region
        // Predicated region
        $region25: #{tpu_custom_call.1} parent=23 // pred_check
          %p131 = pneg %p32
        $region26: #{tpu_custom_call.1} parent=23 // pred_check_branch
          %133 = sbr.rel (%p131) target = $region28
        $region27: #{tpu_custom_call.1} parent=23 // pred_region
          %p134 = scmp.lt.s32.totalorder %s12, 1
          %s135 = scalar_select %p134, %s12, 1
          %s136 = smul.addr %s135, 3
          %s137 = smul.addr %s136, 8
          %s138 = scalar_lea.vmem %s0, %s137
        $region28: #{tpu_custom_call.1} parent=23 // pred_fallthru
          _
      $region24: #{tpu_custom_call.1} parent=5 // pred_fallthru
        _
      %p139 = scmp.le.s32.totalorder 1, %s12
      %p140 = scmp.lt.s32.totalorder %s12, 3
      %p141 = pnand %p139, %p140
      %p142 = pneg %p141
      // Predicated region
      $region29: #{tpu_custom_call.1} parent=5 // pred_check
        _
      $region30: #{tpu_custom_call.1} parent=5 // pred_check_branch
        %144 = sbr.rel (%p141) target = $region32
      $region31: #{tpu_custom_call.1} parent=5 // pred_region
        %s145 = ssub.s32 %s12, 1
        %p146 = scmp.lt.s32.totalorder %s17, 1
        %s147 = scalar_select %p146, %s17, 1
        %s148 = smul.addr %s147, 3
        %s149 = smul.addr %s148, 8
        %s150 = scalar_lea.vmem %s0, %s149
        %p151 = pneg %p38
        %p152 = pneg %p35
        %p153 = pneg %p59
        %p154 = pneg %p56
        %p155 = pneg %p80
        %p156 = pneg %p77
        %p157 = pneg %p106
        %p158 = pneg %p103
        %s159 = sand.u32 %s93, 1
        %s160 = scalar_lea.sflag [#allocation4], %s159
        %s161 = sand.u32 %s93, 1
        %s162 = smul.addr %s161, 8
        %s163 = scalar_lea.vmem [#allocation3], %s162
        %p164 = scmp.lt.s32.totalorder %s17, 1
        %s165 = scalar_select %p164, %s17, 1
        %s166 = smul.addr %s165, 3
        %s167 = smul.addr %s166, 8
        %s168 = scalar_lea.vmem %s0, %s167
        %v169 = vld [vmem:[%s168] sm:$0xff]
        %v170 = vld [vmem:[%s168 + $0x8] sm:$0xff]
        %v171 = vld [vmem:[%s1] sm:$0xf]
        %173 = vset.pattern.permute.xlu0 0
        %174 = vperm.xlu0 %173, %v169
        %v175 = vpop.permute.xlu0 %174
        %178 = vset.pattern.permute.xlu0 0
        %179 = vperm.xlu0 %178, %v170
        %v180 = vpop.permute.xlu0 %179
        %v182 = vlaneseq
        %v183 = vshrl.u32 %v182, 7
        %v184 = vsub.s32 0, %v183
        %v185 = vrot.slane %v171, %v184
        %v186 = vmul.f32 %v175, %v185
        %v187 = vmul.f32 %v180, %v185
        %v188 = vadd.f32 %v186, 0.0
        %v189 = vadd.f32 %v187, 0.0
        %190 = vset.pattern.permute.xlu0 1
        %191 = vperm.xlu0 %190, %v169
        %v192 = vpop.permute.xlu0 %191
        %194 = vset.pattern.permute.xlu0 1
        %195 = vperm.xlu0 %194, %v170
        %v196 = vpop.permute.xlu0 %195
        %v198 = vlaneseq
        %v199 = vshrl.u32 %v198, 7
        %v200 = vsub.s32 1, %v199
        %v201 = vrot.slane %v171, %v200
        %v202 = vmul.f32 %v192, %v201
        %v203 = vmul.f32 %v196, %v201
        %v204 = vadd.f32 %v188, %v202
        %v205 = vadd.f32 %v189, %v203
        %206 = vset.pattern.permute.xlu0 2
        %207 = vperm.xlu0 %206, %v169
        %v208 = vpop.permute.xlu0 %207
        %210 = vset.pattern.permute.xlu0 2
        %211 = vperm.xlu0 %210, %v170
        %v212 = vpop.permute.xlu0 %211
        %v214 = vlaneseq
        %v215 = vshrl.u32 %v214, 7
        %v216 = vsub.s32 2, %v215
        %v217 = vrot.slane %v171, %v216
        %v218 = vmul.f32 %v208, %v217
        %v219 = vmul.f32 %v212, %v217
        %v220 = vadd.f32 %v204, %v218
        %v221 = vadd.f32 %v205, %v219
        %222 = vset.pattern.permute.xlu0 3
        %223 = vperm.xlu0 %222, %v169
        %v224 = vpop.permute.xlu0 %223
        %226 = vset.pattern.permute.xlu0 3
        %227 = vperm.xlu0 %226, %v170
        %v228 = vpop.permute.xlu0 %227
        %v230 = vlaneseq
        %v231 = vshrl.u32 %v230, 7
        %v232 = vsub.s32 3, %v231
        %v233 = vrot.slane %v171, %v232
        %v234 = vmul.f32 %v224, %v233
        %v235 = vmul.f32 %v228, %v233
        %v236 = vadd.f32 %v220, %v234
        %v237 = vadd.f32 %v221, %v235
        %v238 = vld [vmem:[%s168 + $0x1] sm:$0xff]
        %v239 = vld [vmem:[%s168 + $0x9] sm:$0xff]
        %s240 = scalar_lea.vmem %s1, 4
        %v241 = vld [vmem:[%s240] sm:$0xf]
        %243 = vset.pattern.permute.xlu0 0
        %244 = vperm.xlu0 %243, %v238
        %v245 = vpop.permute.xlu0 %244
        %248 = vset.pattern.permute.xlu0 0
        %249 = vperm.xlu0 %248, %v239
        %v250 = vpop.permute.xlu0 %249
        %v252 = vlaneseq
        %v253 = vshrl.u32 %v252, 7
        %v254 = vsub.s32 0, %v253
        %v255 = vrot.slane %v241, %v254
        %v256 = vmul.f32 %v245, %v255
        %v257 = vmul.f32 %v250, %v255
        %v258 = vadd.f32 %v236, %v256
        %v259 = vadd.f32 %v237, %v257
        %260 = vset.pattern.permute.xlu0 1
        %261 = vperm.xlu0 %260, %v238
        %v262 = vpop.permute.xlu0 %261
        %264 = vset.pattern.permute.xlu0 1
        %265 = vperm.xlu0 %264, %v239
        %v266 = vpop.permute.xlu0 %265
        %v268 = vlaneseq
        %v269 = vshrl.u32 %v268, 7
        %v270 = vsub.s32 1, %v269
        %v271 = vrot.slane %v241, %v270
        %v272 = vmul.f32 %v262, %v271
        %v273 = vmul.f32 %v266, %v271
        %v274 = vadd.f32 %v258, %v272
        %v275 = vadd.f32 %v259, %v273
        %276 = vset.pattern.permute.xlu0 2
        %277 = vperm.xlu0 %276, %v238
        %v278 = vpop.permute.xlu0 %277
        %280 = vset.pattern.permute.xlu0 2
        %281 = vperm.xlu0 %280, %v239
        %v282 = vpop.permute.xlu0 %281
        %v284 = vlaneseq
        %v285 = vshrl.u32 %v284, 7
        %v286 = vsub.s32 2, %v285
        %v287 = vrot.slane %v241, %v286
        %v288 = vmul.f32 %v278, %v287
        %v289 = vmul.f32 %v282, %v287
        %v290 = vadd.f32 %v274, %v288
        %v291 = vadd.f32 %v275, %v289
        %292 = vset.pattern.permute.xlu0 3
        %293 = vperm.xlu0 %292, %v238
        %v294 = vpop.permute.xlu0 %293
        %296 = vset.pattern.permute.xlu0 3
        %297 = vperm.xlu0 %296, %v239
        %v298 = vpop.permute.xlu0 %297
        %v300 = vlaneseq
        %v301 = vshrl.u32 %v300, 7
        %v302 = vsub.s32 3, %v301
        %v303 = vrot.slane %v241, %v302
        %v304 = vmul.f32 %v294, %v303
        %v305 = vmul.f32 %v298, %v303
        %v306 = vadd.f32 %v290, %v304
        %v307 = vadd.f32 %v291, %v305
        %v308 = vld [vmem:[%s168 + $0x2] sm:$0xff]
        %v309 = vld [vmem:[%s168 + $0xa] sm:$0xff]
        %s310 = scalar_lea.vmem %s1, 8
        %v311 = vld [vmem:[%s310] sm:$0xf]
        %313 = vset.pattern.permute.xlu0 0
        %314 = vperm.xlu0 %313, %v308
        %v315 = vpop.permute.xlu0 %314
        %318 = vset.pattern.permute.xlu0 0
        %319 = vperm.xlu0 %318, %v309
        %v320 = vpop.permute.xlu0 %319
        %v322 = vlaneseq
        %v323 = vshrl.u32 %v322, 7
        %v324 = vsub.s32 0, %v323
        %v325 = vrot.slane %v311, %v324
        %v326 = vmul.f32 %v315, %v325
        %v327 = vmul.f32 %v320, %v325
        %v328 = vadd.f32 %v306, %v326
        %v329 = vadd.f32 %v307, %v327
        %330 = vset.pattern.permute.xlu0 1
        %331 = vperm.xlu0 %330, %v308
        %v332 = vpop.permute.xlu0 %331
        %334 = vset.pattern.permute.xlu0 1
        %335 = vperm.xlu0 %334, %v309
        %v336 = vpop.permute.xlu0 %335
        %v338 = vlaneseq
        %v339 = vshrl.u32 %v338, 7
        %v340 = vsub.s32 1, %v339
        %v341 = vrot.slane %v311, %v340
        %v342 = vmul.f32 %v332, %v341
        %v343 = vmul.f32 %v336, %v341
        %v344 = vadd.f32 %v328, %v342
        %v345 = vadd.f32 %v329, %v343
        %346 = vset.pattern.permute.xlu0 2
        %347 = vperm.xlu0 %346, %v308
        %v348 = vpop.permute.xlu0 %347
        %350 = vset.pattern.permute.xlu0 2
        %351 = vperm.xlu0 %350, %v309
        %v352 = vpop.permute.xlu0 %351
        %v354 = vlaneseq
        %v355 = vshrl.u32 %v354, 7
        %v356 = vsub.s32 2, %v355
        %v357 = vrot.slane %v311, %v356
        %v358 = vmul.f32 %v348, %v357
        %v359 = vmul.f32 %v352, %v357
        %v360 = vadd.f32 %v344, %v358
        %v361 = vadd.f32 %v345, %v359
        %362 = vset.pattern.permute.xlu0 3
        %363 = vperm.xlu0 %362, %v308
        %v364 = vpop.permute.xlu0 %363
        %366 = vset.pattern.permute.xlu0 3
        %367 = vperm.xlu0 %366, %v309
        %v368 = vpop.permute.xlu0 %367
        %v370 = vlaneseq
        %v371 = vshrl.u32 %v370, 7
        %v372 = vsub.s32 3, %v371
        %v373 = vrot.slane %v311, %v372
        %v374 = vmul.f32 %v364, %v373
        %v375 = vmul.f32 %v368, %v373
        %v376 = vadd.f32 %v360, %v374
        %v377 = vadd.f32 %v361, %v375
        %v378 = vld [vmem:[%s2] sm:$0x1]
        %v380 = vlaneseq
        %v381 = vshrl.u32 %v380, 7
        %v382 = vsub.s32 0, %v381
        %v383 = vrot.slane %v378, %v382
        %v385 = vadd.f32 %v376, %v383
        %v386 = vadd.f32 %v377, %v383
        %v387 = vmax.f32 %v385, 0.0
        %v388 = vmax.f32 %v386, 0.0
        %vm389 = vcmask 64512
        %390 = vst.msk [vmem:[#allocation2] sm:$0xff] %vm389, %v387
        %391 = vst.msk [vmem:[#allocation2 + $0x8] sm:$0xff] %vm389, %v388
        %v392 = vld [vmem:[#allocation2] ss:$2 sm:$0xff]
        %s393 = scalar_lea.vmem [#allocation2], 1
        %v394 = vld [vmem:[%s393] ss:$2 sm:$0xff]
        %v395 = vmax.f32 %v392, %v394
        %396 = vst.msk [vmem:[%s163] sm:$0xff] %vm389, %v395
        %s397 = sand.u32 %s93, 1
        %s398 = scalar_lea.sflag [#allocation4], %s397
        %s399 = sand.u32 %s93, 1
        %s400 = smul.addr %s399, 8
        %s401 = scalar_lea.vmem [#allocation3], %s400
        // Predicated region
        $region33: #{tpu_custom_call.1} parent=31 // pred_check
          %p402 = pneg %p103
        $region34: #{tpu_custom_call.1} parent=31 // pred_check_branch
          %404 = sbr.rel (%p402) target = $region36
        $region35: #{tpu_custom_call.1} parent=31 // pred_region
          %s406 = ssub.s32 128, 128
          %407 = vsyncadd %s398, %s406
          %s408 = smul.addr %s17, 128
          %s409 = scalar_lea.hbm %s3, %s408
          %s411 = sshll.u32 %s401, 4
          %s412 = int_to_ptr.vmem [resolvable:$true] %s411
          %414 = dma.vmem_to_hbm [thread:$0]  %s412, 128, %s409, %s398
        $region36: #{tpu_custom_call.1} parent=31 // pred_fallthru
          _
      $region32: #{tpu_custom_call.1} parent=5 // pred_fallthru
        _
      %p415 = scmp.le.s32.totalorder 2, %s12
      // Predicated region
      $region37: #{tpu_custom_call.1} parent=5 // pred_check
        %p416 = pneg %p415
      $region38: #{tpu_custom_call.1} parent=5 // pred_check_branch
        %418 = sbr.rel (%p416) target = $region40
      $region39: #{tpu_custom_call.1} parent=5 // pred_region
        %s419 = ssub.s32 %s12, 2
        // Predicated region
        $region41: #{tpu_custom_call.1} parent=39 // pred_check
          %p420 = pneg %p109
        $region42: #{tpu_custom_call.1} parent=39 // pred_check_branch
          %422 = sbr.rel (%p420) target = $region44
        $region43: #{tpu_custom_call.1} parent=39 // pred_region
          %s423 = sand.u32 %s94, 1
          %s424 = scalar_lea.sflag [#allocation4], %s423
          %s425 = sand.u32 %s94, 1
          %s426 = smul.addr %s425, 8
          %s427 = scalar_lea.vmem [#allocation3], %s426
          %428 = dma.done %s424, 128
        $region44: #{tpu_custom_call.1} parent=39 // pred_fallthru
          _
      $region40: #{tpu_custom_call.1} parent=5 // pred_fallthru
        _
    $region6: #{tpu_custom_call.1} parent=1 // loop_footer
      %s16 = sadd.s32 1, %s12
    $region7: #{tpu_custom_call.1} parent=1 // loop_footer_branch
      %11 = sbr.rel target = $region3
    $region8: #{tpu_custom_call.1} parent=1 // loop_exit
      _
    %429 = vsyncpa [#allocation4], 1
    %s430 = scalar_lea.sflag [#allocation4], 1
    %431 = vsyncpa %s430, 1

</llo_original>
